<compile_context>
chip_gen: v7x
topology: tpu7x:2x2x1
jax: 0.10.0
libtpu: 0.0.40
codegen_flags: <defaults>
</compile_context>

<pallas_src>
import functools

import numpy as np
import jax
import jax.numpy as jnp
from jax.experimental import pallas as pl
from jax.experimental.pallas import tpu as pltpu

# db4 lowpass synthesis filter (pywt 'db4' rec_lo).  pytorch_wavelets' analysis
# filter is dec_lo[::-1] == rec_lo and its synthesis filter is rec_lo, so one
# table serves both the forward and the inverse transform.
_DB4_REC_LO = np.array([
    0.23037781330885523,
    0.7148465705525415,
    0.6308807679295904,
    -0.027983769416983849,
    -0.18703481171888114,
    0.030841381835986965,
    0.032883011666982945,
    -0.010597401784997278,
], dtype=np.float64)


# ----------------------------- host-side matrix build -----------------------------
def _analysis_matrix(n_in, filt):
    """A (n_in, n_out) with  lowpass_downsample(x) == x @ A   (afb1d, mode='zero')."""
    L = filt.shape[0]
    n_out = (n_in + L - 1) // 2                  # pywt.dwt_coeff_len, mode='zero'
    p = 2 * (n_out - 1) - n_in + L
    pad_left = p // 2
    i = np.arange(n_in)[:, None]
    k = np.arange(n_out)[None, :]
    t = pad_left + i - 2 * k
    valid = (t >= 0) & (t < L)
    return np.where(valid, filt[np.clip(t, 0, L - 1)], 0.0)


def _synthesis_matrix(n_in, filt):
    """S (n_in, n_out) with  conv_transpose(lo, g, stride=2, pad=L-2) == lo @ S."""
    L = filt.shape[0]
    P = L - 2
    n_out = 2 * n_in - P
    k = np.arange(n_in)[:, None]
    j = np.arange(n_out)[None, :]
    t = j + P - 2 * k
    valid = (t >= 0) & (t < L)
    return np.where(valid, filt[np.clip(t, 0, L - 1)], 0.0)


@functools.lru_cache(maxsize=32)
def _composed_matrix_np(length, n_levels):
    """Single (L, L_out) float32 matrix: x @ M == idwt(dwt(x).lowpass, zero details).

    Composed in float64 on the host and cast to float32 once at the end.
    NOTE: M is banded (bandwidth ~ O(2**n_levels * filter_len)); a band-aware
    blocked layout would make FLOPs / matrix-HBM traffic O(L*band) instead of
    O(L^2) for very long sequences (not implemented here).
    """
    filt = _DB4_REC_LO
    lens = [length]
    mats = []
    for _ in range(n_levels):                    # forward DWT, lowpass path only
        A = _analysis_matrix(lens[-1], filt)
        mats.append(A)
        lens.append(A.shape[1])
    cur = lens[n_levels]                         # yl length
    for i in range(n_levels):                    # inverse DWT, coarsest level first
        target_in = lens[n_levels - i]           # detail length at this stage
        S = _synthesis_matrix(target_in, filt)
        if cur > target_in:                      # DWT1DInverse lowpass trim -> zero rows
            S = np.concatenate(
                [S, np.zeros((cur - target_in, S.shape[1]), np.float64)], axis=0)
        mats.append(S)
        cur = S.shape[1]
    M = mats[0]
    for m in mats[1:]:
        M = M @ m
    return np.asarray(M, dtype=np.float32)


@functools.lru_cache(maxsize=32)
def _composed_matrix_device(length, n_levels, l_pad, out_pad):
    """Zero-padded (l_pad, out_pad) composed matrix, uploaded to device once."""
    M = _composed_matrix_np(length, n_levels)
    Mp = np.zeros((l_pad, out_pad), np.float32)
    Mp[:M.shape[0], :M.shape[1]] = M
    return jnp.asarray(Mp)


# ----------------------------- tiling heuristics -----------------------------
def _round_up(x, m):
    return ((x + m - 1) // m) * m


def _cdiv(a, b):
    return (a + b - 1) // b


def _vmem_capacity_bytes():
    try:
        cap = getattr(pltpu.get_tpu_info(), "vmem_capacity_bytes", None)
        if cap:
            return int(cap)
    except Exception:
        pass
    return 128 << 20


def _make_plan(B, L, out_len):
    """Per-chip tile sizes, grid extents, padded shapes and VMEM limit."""
    vmem_cap = _vmem_capacity_bytes()
    big_vmem = vmem_cap >= (96 << 20)        # v5e / v6e: 128 MiB physical VMEM
    multi_core = not big_vmem                # 64 MiB VMEM => v7x-class, 2 TensorCores

    budget = (100 << 20) if big_vmem else (40 << 20)   # kernel working-set budget
    tb_cap = 512 if big_vmem else 256
    tk_cap = 4096 if big_vmem else 2048
    tn_cap = 2048 if big_vmem else 1024

    # ---- output-column tiling (lane-dense, balanced) ----
    out_pad0 = _round_up(out_len, 128)
    if out_pad0 <= tn_cap:
        tn, num_cols = out_pad0, 1
    else:
        num_cols = _cdiv(out_pad0, tn_cap)
        tn = _round_up(_cdiv(out_pad0, num_cols), 128)
        num_cols = _cdiv(out_pad0, tn)
    out_pad = num_cols * tn

    # ---- is the whole composed matrix VMEM-resident? ----
    # (default pipelining still allocates two buffers for it, hence the factor 2)
    m_bytes = 4 * L * out_pad
    m_resident = 2 * m_bytes <= budget // 2

    # ---- K tiling ----
    if m_resident:
        tk, num_k, l_pad = L, 1, L            # x keeps its true length (full-extent block)
    else:
        m_budget = budget // 2
        tk_mem = max(128, (m_budget // (2 * 4 * tn)) // 128 * 128)
        tk_max = max(128, min(tk_cap, tk_mem))
        # Balanced K chunks; L is rounded UP to a multiple of tk (extra matrix
        # rows and x columns are zero), no "tk must divide L" fallback.
        num_k = _cdiv(_round_up(L, 128), tk_max)
        tk = _round_up(_cdiv(L, num_k), 128)
        num_k = _cdiv(L, tk)
        l_pad = num_k * tk

    # ---- row tiling ----
    out_budget = budget // 4                  # double-buffered (TB, tn) f32 output block
    x_budget = budget // 4                    # double-buffered (TB, tk) f32 input block
    tb_mem = min(out_budget // (2 * 4 * tn), x_budget // (2 * 4 * tk))
    tb_mem = max(8, (tb_mem // 8) * 8)
    TB = max(8, min(tb_cap, _round_up(B, 8), tb_mem))
    num_rows = _cdiv(B, TB)

    # ---- ensure a multi-core (v7x-class) part gets >= 2 parallel grid tiles ----
    if multi_core and num_rows * num_cols < 2:
        if num_cols == 1 and out_pad % 256 == 0:
            tn //= 2                          # split columns: no extra padding, TB intact
            num_cols = 2
        elif num_rows == 1 and B >= 16:
            TB = max(8, _round_up(_cdiv(B, 2), 8))
            num_rows = _cdiv(B, TB)

    # ---- VMEM limit: never below the actual double-buffered working set ----
    if m_resident:
        ws = 4 * (2 * TB * l_pad + 2 * l_pad * out_pad + 2 * TB * tn)
        if num_cols > 1:                      # allow for an in-kernel column-slice copy
            ws += 4 * l_pad * tn
    else:
        ws = 4 * (2 * TB * tk + 2 * tk * tn + 2 * TB * tn)
    cap_limit = (110 << 20) if big_vmem else (44 << 20)
    vmem_limit = int(min(cap_limit, max(24 << 20, ws + (8 << 20))))
    vmem_limit = int(max(vmem_limit, ws + (2 << 20)))

    return dict(TB=TB, tk=tk, tn=tn, num_rows=num_rows, num_cols=num_cols,
                num_k=num_k, l_pad=l_pad, out_pad=out_pad,
                m_resident=m_resident, vmem_limit=vmem_limit)


# ----------------------------- kernels -----------------------------
def _streamed_kernel(x_ref, m_ref, o_ref):
    # Grid = (rows, cols, K); the output block is resident across the last
    # ("arbitrary") K axis -> zero-init on the first K step, then accumulate.
    @pl.when(pl.program_id(2) == 0)
    def _():
        o_ref[...] = jnp.zeros_like(o_ref)
    o_ref[...] += jnp.dot(x_ref[...], m_ref[...],
                          preferred_element_type=jnp.float32)


def _make_resident_kernel(num_cols, tn):
    # The composed matrix lives in one VMEM block with a constant index_map, so
    # it is fetched from HBM exactly once per kernel call (no per-row-tile
    # re-streaming).  The per-column-tile slice is taken in-kernel.
    def kernel(x_ref, m_ref, o_ref):
        if num_cols > 1:
            j0 = pl.multiple_of(pl.program_id(1) * tn, 128)
            m = m_ref[:, pl.ds(j0, tn)]
        else:
            m = m_ref[...]
        o_ref[...] = jnp.dot(x_ref[...], m, preferred_element_type=jnp.float32)
    return kernel


# ----------------------------- public wrapper -----------------------------
def wavelet_decomposition(x, n_levels=2):
    """x: (N, C, L) -> (n_levels+1, N, C, L_out) float32.

    Component 0 is the lowpass-only reconstruction; the detail components of the
    reference module are identically zero (all-zero mask on yh, zeroed yl)."""
    N, C, L = x.shape
    B = N * C
    M_np = _composed_matrix_np(L, n_levels)
    out_len = M_np.shape[1]

    p = _make_plan(B, L, out_len)
    TB, tk, tn = p["TB"], p["tk"], p["tn"]
    num_rows, num_cols, num_k = p["num_rows"], p["num_cols"], p["num_k"]
    l_pad, out_pad = p["l_pad"], p["out_pad"]
    B_pad = num_rows * TB

    xr = jnp.asarray(x, jnp.float32).reshape(B, L)
    if B_pad != B or l_pad != L:               # pad only when actually needed
        xr = jnp.pad(xr, ((0, B_pad - B), (0, l_pad - L)))

    m_dev = _composed_matrix_device(L, n_levels, l_pad, out_pad)

    if p["m_resident"]:
        # Constant index_map -> the matrix block is DMA'd once for the whole grid.
        # (The default pipeliner still double-buffers it; that only costs VMEM and
        # is accounted for in the budget.  pl.Buffered(1) would reclaim it but is
        # left off for lowering portability.)
        out = pl.pallas_call(
            _make_resident_kernel(num_cols, tn),
            out_shape=jax.ShapeDtypeStruct((B_pad, out_pad), jnp.float32),
            grid_spec=pltpu.PrefetchScalarGridSpec(
                num_scalar_prefetch=0,
                grid=(num_rows, num_cols),
                in_specs=[
                    pl.BlockSpec((TB, l_pad), lambda i, j: (i, 0)),
                    pl.BlockSpec((l_pad, out_pad), lambda i, j: (0, 0)),
                ],
                out_specs=pl.BlockSpec((TB, tn), lambda i, j: (i, j)),
            ),
            compiler_params=pltpu.CompilerParams(
                dimension_semantics=("parallel", "parallel"),
                vmem_limit_bytes=p["vmem_limit"],
            ),
        )(xr, m_dev)
    else:
        out = pl.pallas_call(
            _streamed_kernel,
            out_shape=jax.ShapeDtypeStruct((B_pad, out_pad), jnp.float32),
            grid_spec=pltpu.PrefetchScalarGridSpec(
                num_scalar_prefetch=0,
                grid=(num_rows, num_cols, num_k),      # reduction axis last
                in_specs=[
                    pl.BlockSpec((TB, tk), lambda i, j, k: (i, k)),
                    pl.BlockSpec((tk, tn), lambda i, j, k: (k, j)),
                ],
                out_specs=pl.BlockSpec((TB, tn), lambda i, j, k: (i, j)),
            ),
            compiler_params=pltpu.CompilerParams(
                dimension_semantics=("parallel", "parallel", "arbitrary"),
                vmem_limit_bytes=p["vmem_limit"],
            ),
        )(xr, m_dev)

    comp0 = out
    if B_pad != B or out_pad != out_len:       # slice only when actually padded
        comp0 = comp0[:B, :out_len]
    comp0 = comp0.reshape(N, C, out_len)
    # Detail components are exactly zero; they are never computed/stored by the kernel.
    zeros = jnp.zeros((n_levels,) + comp0.shape, comp0.dtype)
    return jnp.concatenate([comp0[None], zeros], axis=0)


# ----------------------- pure-numpy reference (for checking) -----------------------
def _reference_numpy(x, n_levels=2):
    filt = _DB4_REC_LO.astype(np.float32)
    L = filt.shape[0]

    def afb_lo(sig):
        n = sig.shape[-1]
        n_out = (n + L - 1) // 2
        p = 2 * (n_out - 1) - n + L
        s = sig
        if p % 2 == 1:
            s = np.concatenate([s, np.zeros(s.shape[:-1] + (1,), s.dtype)], -1)
        s = np.pad(s, [(0, 0)] * (s.ndim - 1) + [(p // 2, p // 2)])
        out = np.zeros(sig.shape[:-1] + (n_out,), np.float32)
        for k in range(n_out):
            out[..., k] = np.sum(s[..., 2 * k:2 * k + L] * filt, axis=-1)
        return out

    def sfb_lo(lo):
        n = lo.shape[-1]
        full = np.zeros(lo.shape[:-1] + ((n - 1) * 2 + L,), np.float32)
        for k in range(n):
            full[..., 2 * k:2 * k + L] += lo[..., k:k + 1] * filt
        return full[..., L - 2:L - 2 + (2 * n - (L - 2))]

    lens = [x.shape[-1]]
    y = x.astype(np.float32)
    for _ in range(n_levels):
        y = afb_lo(y)
        lens.append(y.shape[-1])
    x0 = y
    for i in range(n_levels):
        target = lens[n_levels - i]
        if x0.shape[-1] > target:
            x0 = x0[..., :target]
        x0 = sfb_lo(x0)
    zeros = np.zeros_like(x0)
    return np.stack([x0] + [zeros] * n_levels, axis=0)


if __name__ == "__main__":
    key = jax.random.PRNGKey(0)
    x = jax.random.normal(key, (2, 4, 16), dtype=jnp.float32)   # (N, C, L)

    out = wavelet_decomposition(x)
    out = jax.block_until_ready(out)

    ref = _reference_numpy(np.asarray(x))
    assert out.shape == (3, 2, 4, 16), out.shape
    np.testing.assert_allclose(np.asarray(out), ref, rtol=1e-4, atol=1e-4)
    print("KERNEL_OK")
</pallas_src>

<mosaic_0001>
module attributes {stable_mosaic.version = 11 : i64} {
  func.func @kernel(%arg0: i32, %arg1: i32, %arg2: memref<8x16xf32, #tpu.memory_space<vmem>>, %arg3: memref<16x128xf32, #tpu.memory_space<vmem>>, %arg4: memref<8x128xf32, #tpu.memory_space<vmem>>) attributes {dimension_semantics = [#tpu.dimension_semantics<parallel>, #tpu.dimension_semantics<parallel>], iteration_bounds = array<i64: 1, 1>, scalar_prefetch = 0 : i64, scratch_operands = 0 : i64, tpu.core_type = #tpu.core_type<tc>, window_params = [{transform_indices = @transform_0, window_bounds = array<i64: 8, 16>}, {pipeline_mode = #tpu.pipeline_mode<synchronous>, transform_indices = @transform_1, window_bounds = array<i64: 16, 128>}, {transform_indices = @transform_2, window_bounds = array<i64: 8, 128>}]} {
    %c0 = arith.constant 0 : index
    %c0_0 = arith.constant 0 : index
    %0 = vector.load %arg3[%c0, %c0_0] : memref<16x128xf32, #tpu.memory_space<vmem>>, vector<16x128xf32>
    %c0_1 = arith.constant 0 : index
    %c0_2 = arith.constant 0 : index
    %1 = vector.load %arg2[%c0_1, %c0_2] : memref<8x16xf32, #tpu.memory_space<vmem>>, vector<8x16xf32>
    %cst = arith.constant dense<0.000000e+00> : vector<8x128xf32>
    %2 = tpu.matmul %1, %0, %cst {dimension_numbers = #tpu.dot_dimension_numbers<[1], [0], [0], [1], [0, 0, 1, 1], [], []>} : vector<8x16xf32>, vector<16x128xf32>, vector<8x128xf32> -> vector<8x128xf32>
    %c0_3 = arith.constant 0 : index
    %c0_4 = arith.constant 0 : index
    %3 = vector.load %arg4[%c0_3, %c0_4] : memref<8x128xf32, #tpu.memory_space<vmem>>, vector<8x128xf32>
    tpu.vector_store %arg4[%c0_3, %c0_4], %2 {strides = array<i32>} : memref<8x128xf32, #tpu.memory_space<vmem>>, vector<8x128xf32>,
    return
  }
  func.func @transform_0(%arg0: i32, %arg1: i32) -> (i32, i32) {
    %c0_i32 = arith.constant 0 : i32
    %c0_i32_0 = arith.constant 0 : i32
    return %arg0, %c0_i32 : i32, i32
  }
  func.func @transform_1(%arg0: i32, %arg1: i32) -> (i32, i32) {
    %c0_i32 = arith.constant 0 : i32
    %c0_i32_0 = arith.constant 0 : i32
    %c0_i32_1 = arith.constant 0 : i32
    return %c0_i32, %c0_i32_0 : i32, i32
  }
  func.func @transform_2(%arg0: i32, %arg1: i32) -> (i32, i32) {
    %c0_i32 = arith.constant 0 : i32
    return %arg0, %arg1 : i32, i32
  }
}

</mosaic_0001>

<llo_original>
// kernel: tpu_custom_call.1
$region0: #{tpu_custom_call.1}
  #allocation0 [shape = 'u32[]', space=smem, size = 0x4, offset = 0x4, fixed_abs, tag = 'smem constant byte address 0x4 - core index']
  #allocation1 [shape = 'u32[144,128]{1,0:T(1,128)}', space=vmem, size = 0x12000, scoped, tag = 'internal scratch']
  %s0 = inlined_call_operand.hbm [shape: f32[8,16], index: 0, kind: input, shape index: {}]
  %s1 = inlined_call_operand.hbm [shape: f32[16,128], index: 1, kind: input, shape index: {}]
  %s2 = inlined_call_operand.hbm [shape: f32[8,128], index: 2, kind: output, shape index: {}]
  %s3 = sld [smem:[#allocation0]]
  $region26: #{tpu_custom_call.1} parent=0
    _
  %s5 = ssub.s32 1, %s3
  %s6 = scalar_select 0, %s5, %s3
  $region1: #{tpu_custom_call.1} parent=0
    #allocation2 [shape = 'u8[4096]{0}', space=vmem, size = 0x1000, scoped, tag = 'input window, operand 0, single buffered']
    #allocation3 [shape = 's32[1]{0}', space=sflag, size = 0x4, scoped, tag = 'scoped memory for tpu_custom_call.1']
    #allocation4 [shape = 's32[1]{0}', space=sflag, size = 0x4, scoped, tag = 'scoped memory for tpu_custom_call.1']
    #allocation5 [shape = 'u8[8192]{0}', space=vmem, size = 0x2000, scoped, tag = 'input window, operand 1, single buffered']
    #allocation6 [shape = 's32[1]{0}', space=sflag, size = 0x4, scoped, tag = 'scoped memory for tpu_custom_call.1']
    #allocation7 [shape = 'u8[4096]{0}', space=vmem, size = 0x1000, scoped, tag = 'output window, operand 0, single buffered']
    %7 = vsyncpa [#allocation3], 0
    %8 = vsyncpa [#allocation6], 0
    %9 = vsyncpa [#allocation4], 0
    // Predicated region
    $region2: #{tpu_custom_call.1} parent=1 // pred_check
      _
    $region3: #{tpu_custom_call.1} parent=1 // pred_check_branch
      %11 = sbr.rel (0) target = $region5
    $region4: #{tpu_custom_call.1} parent=1 // pred_region
      %s13 = ssub.s32 128, 128
      %14 = vsyncadd [#allocation3], %s13
      %s16 = sshll.u32 [#allocation2], 4
      %s17 = int_to_ptr.vmem [resolvable:$true] %s16
      %19 = dma.hbm_to_vmem [thread:$0]  %s0, 128, %s17, [#allocation3]
    $region5: #{tpu_custom_call.1} parent=1 // pred_fallthru
      _
    // Predicated region
    $region6: #{tpu_custom_call.1} parent=1 // pred_check
      _
    $region7: #{tpu_custom_call.1} parent=1 // pred_check_branch
      %21 = sbr.rel (0) target = $region9
    $region8: #{tpu_custom_call.1} parent=1 // pred_region
      %s23 = ssub.s32 256, 256
      %24 = vsyncadd [#allocation6], %s23
      %s25 = sshll.u32 [#allocation5], 4
      %s26 = int_to_ptr.vmem [resolvable:$true] %s25
      %31 = dma.hbm_to_vmem [thread:$0]  %s1, 256, %s26, [#allocation6], 128, 128, 8
    $region9: #{tpu_custom_call.1} parent=1 // pred_fallthru
      _
    // Predicated region
    $region10: #{tpu_custom_call.1} parent=1 // pred_check
      _
    $region11: #{tpu_custom_call.1} parent=1 // pred_check_branch
      %33 = sbr.rel (0) target = $region13
    $region12: #{tpu_custom_call.1} parent=1 // pred_region
      %34 = dma.done [#allocation3], 128
    $region13: #{tpu_custom_call.1} parent=1 // pred_fallthru
      _
    // Predicated region
    $region14: #{tpu_custom_call.1} parent=1 // pred_check
      _
    $region15: #{tpu_custom_call.1} parent=1 // pred_check_branch
      %36 = sbr.rel (0) target = $region17
    $region16: #{tpu_custom_call.1} parent=1 // pred_region
      %37 = dma.done [#allocation6], 256
    $region17: #{tpu_custom_call.1} parent=1 // pred_fallthru
      _
    %v38 = vld [vmem:[#allocation5] sm:$0xff]
    %v39 = vld [vmem:[#allocation5 + $0x8] sm:$0xff]
    %v40 = vld [vmem:[#allocation2] sm:$0xff]
    %vm41 = vcmask 130048
    %v43 = vsel %vm41, %v40, 0
    %45 = vmatprep.subr.mxu0 0.0
    %46 = vmatpush1.msra.mxu0 %v38
    %47 = vmatprep.subr.mxu0 0.0
    %48 = vmatpush1.msra.mxu0 %v39
    %49 = vmatprep.subr.mxu0 0.0
    %50 = vmatpush1.msra.mxu0 0.0
    %51 = vmatprep.subr.mxu0 0.0
    %52 = vmatpush1.msra.mxu0 0.0
    %53 = vmatprep.subr.mxu0 0.0
    %54 = vmatpush1.msra.mxu0 0.0
    %55 = vmatprep.subr.mxu0 0.0
    %56 = vmatpush1.msra.mxu0 0.0
    %57 = vmatprep.subr.mxu0 0.0
    %58 = vmatpush1.msra.mxu0 0.0
    %59 = vmatprep.subr.mxu0 0.0
    %60 = vmatpush1.msra.mxu0 0.0
    %61 = vmatprep.subr.mxu0 0.0
    %62 = vmatpush1.msra.mxu0 0.0
    %63 = vmatprep.subr.mxu0 0.0
    %64 = vmatpush1.msra.mxu0 0.0
    %65 = vmatprep.subr.mxu0 0.0
    %66 = vmatpush1.msra.mxu0 0.0
    %67 = vmatprep.subr.mxu0 0.0
    %68 = vmatpush1.msra.mxu0 0.0
    %69 = vmatprep.subr.mxu0 0.0
    %70 = vmatpush1.msra.mxu0 0.0
    %71 = vmatprep.subr.mxu0 0.0
    %72 = vmatpush1.msra.mxu0 0.0
    %73 = vmatprep.subr.mxu0 0.0
    %74 = vmatpush1.msra.mxu0 0.0
    %75 = vmatprep.subr.mxu0 0.0
    %76 = vmatpush1.msra.mxu0 0.0
    %77 = vmatprep.subr.mxu0 0.0
    %78 = vmatpush1.msra.mxu0 0.0
    %79 = vmatprep.subr.mxu0 0.0
    %80 = vmatpush1.msra.mxu0 0.0
    %81 = vmatprep.subr.mxu0 0.0
    %82 = vmatpush1.msra.mxu0 0.0
    %83 = vmatprep.subr.mxu0 0.0
    %84 = vmatpush1.msra.mxu0 0.0
    %85 = vmatprep.subr.mxu0 0.0
    %86 = vmatpush1.msra.mxu0 0.0
    %87 = vmatprep.subr.mxu0 0.0
    %88 = vmatpush1.msra.mxu0 0.0
    %89 = vmatprep.subr.mxu0 0.0
    %90 = vmatpush1.msra.mxu0 0.0
    %91 = vmatprep.subr.mxu0 0.0
    %92 = vmatpush1.msra.mxu0 0.0
    %93 = vmatprep.subr.mxu0 0.0
    %94 = vmatpush1.msra.mxu0 0.0
    %95 = vmatprep.subr.mxu0 0.0
    %96 = vmatpush1.msra.mxu0 0.0
    %97 = vmatprep.subr.mxu0 0.0
    %98 = vmatpush1.msra.mxu0 0.0
    %99 = vmatprep.subr.mxu0 0.0
    %100 = vmatpush1.msra.mxu0 0.0
    %101 = vmatprep.subr.mxu0 0.0
    %102 = vmatpush1.msra.mxu0 0.0
    %103 = vmatprep.subr.mxu0 0.0
    %104 = vmatpush1.msra.mxu0 0.0
    %105 = vmatprep.subr.mxu0 0.0
    %106 = vmatpush1.msra.mxu0 0.0
    %107 = vmatprep.subr.mxu0 0.0
    %108 = vmatpush1.msra.mxu0 0.0
    %109 = vmatprep.mubr.f32.mxu0 0.0
    %110 = vmatmul.mubr.f32.gmra.mrb[0].mxu0 %v43
    %v111 = vpop.f32.mrb[0].mxu0
    %v112 = vadd.f32 0.0, %v111
    %v113 = vpop.f32.mrb[0].mxu0
    %114 = vdwg.mxu0
    %115 = vst [vmem:[#allocation7] sm:$0xff] %v112
    // Predicated region
    $region18: #{tpu_custom_call.1} parent=1 // pred_check
      _
    $region19: #{tpu_custom_call.1} parent=1 // pred_check_branch
      %117 = sbr.rel (0) target = $region21
    $region20: #{tpu_custom_call.1} parent=1 // pred_region
      %s119 = ssub.s32 128, 128
      %120 = vsyncadd [#allocation4], %s119
      %s122 = sshll.u32 [#allocation7], 4
      %s123 = int_to_ptr.vmem [resolvable:$true] %s122
      %125 = dma.vmem_to_hbm [thread:$0]  %s123, 128, %s2, [#allocation4]
    $region21: #{tpu_custom_call.1} parent=1 // pred_fallthru
      _
    // Predicated region
    $region22: #{tpu_custom_call.1} parent=1 // pred_check
      _
    $region23: #{tpu_custom_call.1} parent=1 // pred_check_branch
      %127 = sbr.rel (0) target = $region25
    $region24: #{tpu_custom_call.1} parent=1 // pred_region
      %128 = dma.done [#allocation4], 128
    $region25: #{tpu_custom_call.1} parent=1 // pred_fallthru
      _
    %129 = vsyncpa [#allocation3], 1
    %130 = vsyncpa [#allocation6], 1
    %131 = vsyncpa [#allocation4], 1

</llo_original>
